<compile_context>
chip_gen: v7x
topology: tpu7x:2x2x1
jax: 0.10.0
libtpu: 0.0.40
codegen_flags: <defaults>
</compile_context>

<pallas_src>
import math

import jax
import jax.numpy as jnp
from jax.experimental import pallas as pl
from jax.experimental.pallas import tpu as pltpu

d_k = d_v = 32


def _sdpa_kernel(q_ref, k_ref, v_ref, mask_ref, ctx_ref, attn_ref):
    # Block shapes:
    #   q_ref    : (G, TQ, Dk)
    #   k_ref    : (G, Lk, Dk)
    #   v_ref    : (G, Lk, Dv)
    #   mask_ref : (G, TQ, Lk) int8, nonzero = masked
    #   ctx_ref  : (1, TQ, G*Dv)   (lane-dense packed heads)
    #   attn_ref : (G, TQ, Lk)
    G = q_ref.shape[0]
    TQ = q_ref.shape[1]
    Dv = v_ref.shape[2]

    # Fold the 1/sqrt(d_k) scale into Q (Lq*Dk elements instead of Lq*Lk).
    inv_sqrt_dk = jnp.asarray(1.0 / math.sqrt(d_k), dtype=q_ref.dtype)
    q = q_ref[...] * inv_sqrt_dk          # (G, TQ, Dk)
    k = k_ref[...]                        # (G, Lk, Dk)
    v = v_ref[...]                        # (G, Lk, Dv)
    m = mask_ref[...]                     # (G, TQ, Lk) int8

    # scores = Q @ K^T  (batched MXU matmul, contraction over Dk, f32 acc)
    scores = jnp.einsum("gqd,gkd->gqk", q, k,
                        preferred_element_type=jnp.float32)

    # masked_fill_(attn_mask, -1e9)
    scores = jnp.where(m != 0, jnp.float32(-1e9), scores)

    # numerically-stable softmax along last axis
    scores = scores - jnp.max(scores, axis=-1, keepdims=True)
    e = jnp.exp(scores)
    attn = e * pl.reciprocal(jnp.sum(e, axis=-1, keepdims=True), approx=False)

    attn_ref[...] = attn.astype(attn_ref.dtype)

    # context = attn @ V   (batched over heads)
    ctx = jnp.einsum("gqk,gkd->gqd", attn.astype(v.dtype), v,
                     preferred_element_type=jnp.float32)   # (G, TQ, Dv)

    # Pack heads along lanes -> (TQ, G*Dv) for an unmasked, lane-dense store.
    ctx_wide = jnp.concatenate([ctx[g] for g in range(G)], axis=-1)
    ctx_ref[0] = ctx_wide.astype(ctx_ref.dtype)


def _pick_group_size(bh, max_g=8):
    """Largest divisor of bh (<= max_g), preferring >= 2 grid steps."""
    divisors = [g for g in range(1, min(bh, max_g) + 1) if bh % g == 0]
    multi_step = [g for g in divisors if bh // g >= 2]
    return max(multi_step) if multi_step else max(divisors)


def _pick_q_tile(lq):
    """Tile the query axis so (TQ, Lk) blocks stay VMEM-friendly (v7x)."""
    for t in (512, 256, 128):
        if lq % t == 0 and lq >= t:
            return t
    return lq


def scaled_dot_product_attention(Q, K, V, attn_mask):
    """Q, K: [B, H, L, d_k]; V: [B, H, L, d_v]; attn_mask: [B, H, Lq, Lk] bool.

    Returns (context [B, H, Lq, d_v], attn [B, H, Lq, Lk]) — same as the
    PyTorch module's forward.
    """
    B, H, Lq, Dk = Q.shape
    Lk = K.shape[2]
    Dv = V.shape[3]
    BH = B * H

    G = _pick_group_size(BH)        # heads per grid step
    TQ = _pick_q_tile(Lq)           # query rows per grid step
    NG = BH // G
    NQ = Lq // TQ

    q = Q.reshape(BH, Lq, Dk)
    k = K.reshape(BH, Lk, Dk)
    v = V.reshape(BH, Lk, Dv)
    # int8 mask: 4x less DMA than int32; nonzero == masked.
    m = attn_mask.reshape(BH, Lq, Lk).astype(jnp.int8)

    ctx_wide, attn = pl.pallas_call(
        _sdpa_kernel,
        out_shape=(
            jax.ShapeDtypeStruct((NG, Lq, G * Dv), Q.dtype),   # lane-dense ctx
            jax.ShapeDtypeStruct((BH, Lq, Lk), jnp.float32),
        ),
        grid=(NG, NQ),
        in_specs=[
            pl.BlockSpec((G, TQ, Dk), lambda i, j: (i, j, 0)),
            pl.BlockSpec((G, Lk, Dk), lambda i, j: (i, 0, 0)),
            pl.BlockSpec((G, Lk, Dv), lambda i, j: (i, 0, 0)),
            pl.BlockSpec((G, TQ, Lk), lambda i, j: (i, j, 0)),
        ],
        out_specs=(
            pl.BlockSpec((1, TQ, G * Dv), lambda i, j: (i, j, 0)),
            pl.BlockSpec((G, TQ, Lk), lambda i, j: (i, j, 0)),
        ),
        compiler_params=pltpu.CompilerParams(
            dimension_semantics=("parallel", "parallel"),
            vmem_limit_bytes=64 * 1024 * 1024,
        ),
    )(q, k, v, m)

    # Un-pack lane-dense ctx: (NG, Lq, G*Dv) -> (B, H, Lq, Dv)
    ctx = (ctx_wide.reshape(NG, Lq, G, Dv)
                   .transpose(0, 2, 1, 3)
                   .reshape(B, H, Lq, Dv))
    return ctx, attn.reshape(B, H, Lq, Lk)


def _reference(Q, K, V, attn_mask):
    scores = jnp.einsum("bhqd,bhkd->bhqk", Q, K) / jnp.sqrt(jnp.float32(d_k))
    scores = jnp.where(attn_mask, -1e9, scores)
    attn = jax.nn.softmax(scores, axis=-1)
    ctx = jnp.einsum("bhqk,bhkd->bhqd", attn, V)
    return ctx, attn


if __name__ == "__main__":
    key = jax.random.PRNGKey(0)
    kq, kk, kv, km = jax.random.split(key, 4)

    B, H, L = 2, 4, 8
    Q = jax.random.normal(kq, (B, H, L, d_k), dtype=jnp.float32)
    K = jax.random.normal(kk, (B, H, L, d_k), dtype=jnp.float32)
    V = jax.random.normal(kv, (B, H, L, d_v), dtype=jnp.float32)
    # Boolean padding-style mask (True == masked out), like the torch module.
    attn_mask = jax.random.bernoulli(km, p=0.2, shape=(B, H, L, L))

    ctx, attn = scaled_dot_product_attention(Q, K, V, attn_mask)
    jax.block_until_ready((ctx, attn))

    ref_ctx, ref_attn = _reference(Q, K, V, attn_mask)
    assert ctx.shape == (B, H, L, d_v) and attn.shape == (B, H, L, L)
    assert jnp.allclose(ctx, ref_ctx, atol=1e-4, rtol=1e-4)
    assert jnp.allclose(attn, ref_attn, atol=2e-5, rtol=2e-5)

    print("KERNEL_OK")
</pallas_src>

<mosaic_0001>
module attributes {stable_mosaic.version = 11 : i64} {
  func.func @_sdpa_kernel(%arg0: i32, %arg1: i32, %arg2: memref<4x8x32xf32, #tpu.memory_space<vmem>>, %arg3: memref<4x8x32xf32, #tpu.memory_space<vmem>>, %arg4: memref<4x8x32xf32, #tpu.memory_space<vmem>>, %arg5: memref<4x8x8xi8, #tpu.memory_space<vmem>>, %arg6: memref<1x8x128xf32, #tpu.memory_space<vmem>>, %arg7: memref<4x8x8xf32, #tpu.memory_space<vmem>>) attributes {dimension_semantics = [#tpu.dimension_semantics<parallel>, #tpu.dimension_semantics<parallel>], iteration_bounds = array<i64: 2, 1>, scalar_prefetch = 0 : i64, scratch_operands = 0 : i64, tpu.core_type = #tpu.core_type<tc>, window_params = [{transform_indices = @transform_0, window_bounds = array<i64: 4, 8, 32>}, {transform_indices = @transform_1, window_bounds = array<i64: 4, 8, 32>}, {transform_indices = @transform_2, window_bounds = array<i64: 4, 8, 32>}, {transform_indices = @transform_3, window_bounds = array<i64: 4, 8, 8>}, {transform_indices = @transform_4, window_bounds = array<i64: 1, 8, 128>}, {transform_indices = @transform_5, window_bounds = array<i64: 4, 8, 8>}]} {
    %c0 = arith.constant 0 : index
    %c0_0 = arith.constant 0 : index
    %c0_1 = arith.constant 0 : index
    %0 = vector.load %arg2[%c0, %c0_0, %c0_1] : memref<4x8x32xf32, #tpu.memory_space<vmem>>, vector<4x8x32xf32>
    %cst = arith.constant 0.176776692 : f32
    %1 = vector.broadcast %cst : f32 to vector<4x8x32xf32>
    %2 = arith.mulf %0, %1 : vector<4x8x32xf32>
    %c0_2 = arith.constant 0 : index
    %c0_3 = arith.constant 0 : index
    %c0_4 = arith.constant 0 : index
    %3 = vector.load %arg3[%c0_2, %c0_3, %c0_4] : memref<4x8x32xf32, #tpu.memory_space<vmem>>, vector<4x8x32xf32>
    %c0_5 = arith.constant 0 : index
    %c0_6 = arith.constant 0 : index
    %c0_7 = arith.constant 0 : index
    %4 = vector.load %arg4[%c0_5, %c0_6, %c0_7] : memref<4x8x32xf32, #tpu.memory_space<vmem>>, vector<4x8x32xf32>
    %c0_8 = arith.constant 0 : index
    %c0_9 = arith.constant 0 : index
    %c0_10 = arith.constant 0 : index
    %5 = vector.load %arg5[%c0_8, %c0_9, %c0_10] : memref<4x8x8xi8, #tpu.memory_space<vmem>>, vector<4x8x8xi8>
    "tpu.trace_start"() <{level = 10 : i32, message = "gqd,gkd->gqk"}> : () -> ()
    %cst_11 = arith.constant dense<0.000000e+00> : vector<4x8x8xf32>
    %6 = tpu.matmul %2, %3, %cst_11 {dimension_numbers = #tpu.dot_dimension_numbers<[2], [2], [1], [1], [0, 0, 0, 1, 1, 1], [0], [0]>} : vector<4x8x32xf32>, vector<4x8x32xf32>, vector<4x8x8xf32> -> vector<4x8x8xf32>
    %c0_i8 = arith.constant 0 : i8
    "tpu.trace_stop"() : () -> ()
    %7 = vector.broadcast %c0_i8 : i8 to vector<4x8x8xi8>
    %8 = arith.cmpi ne, %5, %7 : vector<4x8x8xi8>
    %cst_12 = arith.constant -1.000000e+09 : f32
    %9 = vector.broadcast %cst_12 : f32 to vector<4x8x8xf32>
    %10 = arith.select %8, %9, %6 : vector<4x8x8xi1>, vector<4x8x8xf32>
    %cst_13 = arith.constant dense<0xFF800000> : vector<4x8xf32>
    %11 = vector.multi_reduction <maximumf>, %10, %cst_13 [2] : vector<4x8x8xf32> to vector<4x8xf32>
    %12 = vector.shape_cast %11 : vector<4x8xf32> to vector<4x8x1xf32>
    %13 = vector.broadcast %12 : vector<4x8x1xf32> to vector<4x8x8xf32>
    %14 = arith.subf %10, %13 : vector<4x8x8xf32>
    %15 = math.exp %14 : vector<4x8x8xf32>
    %cst_14 = arith.constant dense<0.000000e+00> : vector<4x8xf32>
    %16 = vector.multi_reduction <add>, %15, %cst_14 [2] : vector<4x8x8xf32> to vector<4x8xf32>
    %17 = vector.shape_cast %16 : vector<4x8xf32> to vector<4x8x1xf32>
    %18 = tpu.reciprocal %17 : vector<4x8x1xf32> -> vector<4x8x1xf32>
    %19 = vector.broadcast %18 : vector<4x8x1xf32> to vector<4x8x8xf32>
    %20 = arith.mulf %15, %19 : vector<4x8x8xf32>
    %c0_15 = arith.constant 0 : index
    %c0_16 = arith.constant 0 : index
    %c0_17 = arith.constant 0 : index
    %21 = vector.load %arg7[%c0_15, %c0_16, %c0_17] : memref<4x8x8xf32, #tpu.memory_space<vmem>>, vector<4x8x8xf32>
    tpu.vector_store %arg7[%c0_15, %c0_16, %c0_17], %20 {strides = array<i32>} : memref<4x8x8xf32, #tpu.memory_space<vmem>>, vector<4x8x8xf32>,
    "tpu.trace_start"() <{level = 10 : i32, message = "gqk,gkd->gqd"}> : () -> ()
    %cst_18 = arith.constant dense<0.000000e+00> : vector<4x8x32xf32>
    %22 = tpu.matmul %20, %4, %cst_18 {dimension_numbers = #tpu.dot_dimension_numbers<[2], [1], [1], [2], [0, 0, 0, 1, 1, 2], [0], [0]>} : vector<4x8x8xf32>, vector<4x8x32xf32>, vector<4x8x32xf32> -> vector<4x8x32xf32>
    "tpu.trace_stop"() : () -> ()
    %23 = vector.extract_strided_slice %22 {offsets = [0, 0, 0], sizes = [1, 8, 32], strides = [1, 1, 1]} : vector<4x8x32xf32> to vector<1x8x32xf32>
    %24 = vector.shape_cast %23 : vector<1x8x32xf32> to vector<8x32xf32>
    %25 = vector.extract_strided_slice %22 {offsets = [1, 0, 0], sizes = [1, 8, 32], strides = [1, 1, 1]} : vector<4x8x32xf32> to vector<1x8x32xf32>
    %26 = vector.shape_cast %25 : vector<1x8x32xf32> to vector<8x32xf32>
    %27 = vector.extract_strided_slice %22 {offsets = [2, 0, 0], sizes = [1, 8, 32], strides = [1, 1, 1]} : vector<4x8x32xf32> to vector<1x8x32xf32>
    %28 = vector.shape_cast %27 : vector<1x8x32xf32> to vector<8x32xf32>
    %29 = vector.extract_strided_slice %22 {offsets = [3, 0, 0], sizes = [1, 8, 32], strides = [1, 1, 1]} : vector<4x8x32xf32> to vector<1x8x32xf32>
    %30 = vector.shape_cast %29 : vector<1x8x32xf32> to vector<8x32xf32>
    %31 = tpu.concatenate %24, %26, %28, %30 in 1 : vector<8x32xf32>, vector<8x32xf32>, vector<8x32xf32>, vector<8x32xf32> -> vector<8x128xf32>
    %c0_19 = arith.constant 0 : index
    %c0_20 = arith.constant 0 : index
    %c0_21 = arith.constant 0 : index
    %32 = vector.load %arg6[%c0_19, %c0_20, %c0_21] : memref<1x8x128xf32, #tpu.memory_space<vmem>>, vector<1x8x128xf32>
    %33 = vector.shape_cast %32 : vector<1x8x128xf32> to vector<8x128xf32>
    %34 = vector.shape_cast %31 : vector<8x128xf32> to vector<1x8x128xf32>
    tpu.vector_store %arg6[%c0_19, %c0_20, %c0_21], %34 {strides = array<i32>} : memref<1x8x128xf32, #tpu.memory_space<vmem>>, vector<1x8x128xf32>,
    return
  }
  func.func @transform_0(%arg0: i32, %arg1: i32) -> (i32, i32, i32) {
    %c0_i32 = arith.constant 0 : i32
    %c0_i32_0 = arith.constant 0 : i32
    return %arg0, %arg1, %c0_i32 : i32, i32, i32
  }
  func.func @transform_1(%arg0: i32, %arg1: i32) -> (i32, i32, i32) {
    %c0_i32 = arith.constant 0 : i32
    %c0_i32_0 = arith.constant 0 : i32
    %c0_i32_1 = arith.constant 0 : i32
    return %arg0, %c0_i32, %c0_i32_0 : i32, i32, i32
  }
  func.func @transform_2(%arg0: i32, %arg1: i32) -> (i32, i32, i32) {
    %c0_i32 = arith.constant 0 : i32
    %c0_i32_0 = arith.constant 0 : i32
    %c0_i32_1 = arith.constant 0 : i32
    return %arg0, %c0_i32, %c0_i32_0 : i32, i32, i32
  }
  func.func @transform_3(%arg0: i32, %arg1: i32) -> (i32, i32, i32) {
    %c0_i32 = arith.constant 0 : i32
    %c0_i32_0 = arith.constant 0 : i32
    return %arg0, %arg1, %c0_i32 : i32, i32, i32
  }
  func.func @transform_4(%arg0: i32, %arg1: i32) -> (i32, i32, i32) {
    %c0_i32 = arith.constant 0 : i32
    %c0_i32_0 = arith.constant 0 : i32
    return %arg0, %arg1, %c0_i32 : i32, i32, i32
  }
  func.func @transform_5(%arg0: i32, %arg1: i32) -> (i32, i32, i32) {
    %c0_i32 = arith.constant 0 : i32
    %c0_i32_0 = arith.constant 0 : i32
    return %arg0, %arg1, %c0_i32 : i32, i32, i32
  }
}

</mosaic_0001>

<llo_original>
// kernel: tpu_custom_call.1
$region0: #{tpu_custom_call.1}
  #allocation0 [shape = 'u32[]', space=smem, size = 0x4, offset = 0x4, fixed_abs, tag = 'smem constant byte address 0x4 - core index']
  #allocation1 [shape = 'u32[144,128]{1,0:T(1,128)}', space=vmem, size = 0x12000, scoped, tag = 'internal scratch']
  %s0 = inlined_call_operand.hbm [shape: f32[8,8,32], index: 0, kind: input, shape index: {}]
  %s1 = inlined_call_operand.hbm [shape: f32[8,8,32], index: 1, kind: input, shape index: {}]
  %s2 = inlined_call_operand.hbm [shape: f32[8,8,32], index: 2, kind: input, shape index: {}]
  %s3 = inlined_call_operand.hbm [shape: s8[8,8,8], index: 3, kind: input, shape index: {}]
  %s4 = inlined_call_operand.hbm [shape: f32[2,8,128], index: 4, kind: output, shape index: {0}]
  %s5 = inlined_call_operand.hbm [shape: f32[8,8,8], index: 5, kind: output, shape index: {1}]
  %6 = xla_tuple %s4, %s5
  %s7 = sld [smem:[#allocation0]]
  $region73: #{tpu_custom_call.1} parent=0
    _
  %s9 = ssub.s32 1, %s7
  %s10 = scalar_select 0, %s9, %s7
  $region1: #{tpu_custom_call.1} parent=0
    #allocation2 [shape = 'u8[32768]{0}', space=vmem, size = 0x8000, scoped, tag = 'input window, operand 0']
    #allocation3 [shape = 's32[2]{0}', space=sflag, size = 0x8, scoped, tag = 'scoped memory for tpu_custom_call.1']
    #allocation4 [shape = 's32[2]{0}', space=sflag, size = 0x8, scoped, tag = 'scoped memory for tpu_custom_call.1']
    #allocation5 [shape = 'u8[32768]{0}', space=vmem, size = 0x8000, scoped, tag = 'input window, operand 1']
    #allocation6 [shape = 's32[2]{0}', space=sflag, size = 0x8, scoped, tag = 'scoped memory for tpu_custom_call.1']
    #allocation7 [shape = 'u8[32768]{0}', space=vmem, size = 0x8000, scoped, tag = 'input window, operand 2']
    #allocation8 [shape = 'u8[8192]{0}', space=vmem, size = 0x2000, scoped, tag = 'input window, operand 3']
    #allocation9 [shape = 's32[2]{0}', space=sflag, size = 0x8, scoped, tag = 'scoped memory for tpu_custom_call.1']
    #allocation10 [shape = 'u8[8192]{0}', space=vmem, size = 0x2000, scoped, tag = 'output window, operand 0']
    #allocation11 [shape = 'u8[32768]{0}', space=vmem, size = 0x8000, scoped, tag = 'output window, operand 1']
    #allocation12 [shape = 's32[2]{0}', space=sflag, size = 0x8, scoped, tag = 'scoped memory for tpu_custom_call.1']
    %11 = vsyncpa [#allocation3], 0
    %s12 = scalar_lea.sflag [#allocation3], 1
    %13 = vsyncpa %s12, 0
    %14 = vsyncpa [#allocation6], 0
    %s15 = scalar_lea.sflag [#allocation6], 1
    %16 = vsyncpa %s15, 0
    %17 = vsyncpa [#allocation9], 0
    %s18 = scalar_lea.sflag [#allocation9], 1
    %19 = vsyncpa %s18, 0
    %20 = vsyncpa [#allocation4], 0
    %s21 = scalar_lea.sflag [#allocation4], 1
    %22 = vsyncpa %s21, 0
    %23 = vsyncpa [#allocation12], 0
    %s24 = scalar_lea.sflag [#allocation12], 1
    %25 = vsyncpa %s24, 0
    loop: start=0, step=1, limit=4
    $region2: #{tpu_custom_call.1} parent=1 // loop_pre_header
      _
    $region3: #{tpu_custom_call.1} parent=1 // loop_header
      %s27 = sphi 0, %s31
      %p28 = scmp.ge.s32.totalorder %s27, 4
      %s34 = sphi 0, %s46
      %s35 = sphi 0, %s42
      %s36 = sphi 0, %s34
      %s37 = sphi 0, %s35
      %s38 = sphi 0, %s36
      %s39 = sphi 0, %s37
      %s51 = sphi 0, %s53
      %s54 = sphi 0, %s51
      %s55 = sphi 0, %s54
      %s71 = sphi 0, %s55
      %s77 = sphi 0, %s79
      %s80 = sphi 0, %s77
      %s81 = sphi 0, %s80
      %s97 = sphi 0, %s81
      %s103 = sphi 0, %s105
      %s106 = sphi 0, %s103
      %s107 = sphi 0, %s106
      %s123 = sphi 0, %s107
      %s131 = sphi 0, %s133
      %s134 = sphi 0, %s131
      %s135 = sphi 0, %s134
      %s151 = sphi 0, %s135
      %s159 = sphi 0, %s161
      %s162 = sphi 0, %s159
      %s163 = sphi 0, %s162
      %s179 = sphi 0, %s163
      %s187 = sphi 0, %s189
      %s190 = sphi 0, %s187
      %s191 = sphi 0, %s190
      %s207 = sphi 0, %s191
    $region4: #{tpu_custom_call.1} parent=1 // loop_header_branch
      %30 = sbr.rel (%p28) target = $region8
    $region5: #{tpu_custom_call.1} parent=1 // loop_body
      %s32 = ssub.s32 %s27, 1
      %s33 = ssub.s32 %s27, 2
      %s40 = sadd.s32 1, %s35
      %p41 = scmp.ge.s32.totalorder %s40, 1
      %s42 = scalar_select %p41, 0, %s40
      %s43 = sadd.s32 1, %s34
      %s44 = scalar_select %p41, %s43, %s34
      %p45 = scmp.ge.s32.totalorder %s44, 2
      %s46 = scalar_select %p45, 0, %s44
      %s47 = ssub.s32 %s34, %s46
      %s48 = ssub.s32 %s35, %s42
      %s49 = sor.u32 %s47, %s48
      %p50 = scmp.eq.s32.totalorder %s49, 0
      %s52 = sadd.s32 %s51, 1
      %s53 = scalar_select %p50, %s51, %s52
      %p56 = pneg %p50
      %p57 = scmp.eq.s32.totalorder %s27, 1
      %p58 = por %p56, %p57
      %p59 = scmp.ne.s32.totalorder %s51, %s54
      %p60 = scmp.eq.s32.totalorder %s27, 0
      %p61 = por %p59, %p60
      %p62 = scmp.ne.s32.totalorder %s51, %s54
      %p63 = scmp.eq.s32.totalorder %s32, 1
      %p64 = por %p62, %p63
      %p65 = scmp.ne.s32.totalorder %s54, %s55
      %p66 = scmp.eq.s32.totalorder %s32, 0
      %p67 = por %p65, %p66
      %p68 = scmp.ne.s32.totalorder %s54, %s55
      %p69 = scmp.eq.s32.totalorder %s33, 1
      %p70 = por %p68, %p69
      %p72 = scmp.ne.s32.totalorder %s55, %s71
      %p73 = scmp.eq.s32.totalorder %s33, 0
      %p74 = por %p72, %p73
      %s75 = ssub.s32 %s34, %s46
      %p76 = scmp.eq.s32.totalorder %s75, 0
      %s78 = sadd.s32 %s77, 1
      %s79 = scalar_select %p76, %s77, %s78
      %p82 = pneg %p76
      %p83 = scmp.eq.s32.totalorder %s27, 1
      %p84 = por %p82, %p83
      %p85 = scmp.ne.s32.totalorder %s77, %s80
      %p86 = scmp.eq.s32.totalorder %s27, 0
      %p87 = por %p85, %p86
      %p88 = scmp.ne.s32.totalorder %s77, %s80
      %p89 = scmp.eq.s32.totalorder %s32, 1
      %p90 = por %p88, %p89
      %p91 = scmp.ne.s32.totalorder %s80, %s81
      %p92 = scmp.eq.s32.totalorder %s32, 0
      %p93 = por %p91, %p92
      %p94 = scmp.ne.s32.totalorder %s80, %s81
      %p95 = scmp.eq.s32.totalorder %s33, 1
      %p96 = por %p94, %p95
      %p98 = scmp.ne.s32.totalorder %s81, %s97
      %p99 = scmp.eq.s32.totalorder %s33, 0
      %p100 = por %p98, %p99
      %s101 = ssub.s32 %s34, %s46
      %p102 = scmp.eq.s32.totalorder %s101, 0
      %s104 = sadd.s32 %s103, 1
      %s105 = scalar_select %p102, %s103, %s104
      %p108 = pneg %p102
      %p109 = scmp.eq.s32.totalorder %s27, 1
      %p110 = por %p108, %p109
      %p111 = scmp.ne.s32.totalorder %s103, %s106
      %p112 = scmp.eq.s32.totalorder %s27, 0
      %p113 = por %p111, %p112
      %p114 = scmp.ne.s32.totalorder %s103, %s106
      %p115 = scmp.eq.s32.totalorder %s32, 1
      %p116 = por %p114, %p115
      %p117 = scmp.ne.s32.totalorder %s106, %s107
      %p118 = scmp.eq.s32.totalorder %s32, 0
      %p119 = por %p117, %p118
      %p120 = scmp.ne.s32.totalorder %s106, %s107
      %p121 = scmp.eq.s32.totalorder %s33, 1
      %p122 = por %p120, %p121
      %p124 = scmp.ne.s32.totalorder %s107, %s123
      %p125 = scmp.eq.s32.totalorder %s33, 0
      %p126 = por %p124, %p125
      %s127 = ssub.s32 %s34, %s46
      %s128 = ssub.s32 %s35, %s42
      %s129 = sor.u32 %s127, %s128
      %p130 = scmp.eq.s32.totalorder %s129, 0
      %s132 = sadd.s32 %s131, 1
      %s133 = scalar_select %p130, %s131, %s132
      %p136 = pneg %p130
      %p137 = scmp.eq.s32.totalorder %s27, 1
      %p138 = por %p136, %p137
      %p139 = scmp.ne.s32.totalorder %s131, %s134
      %p140 = scmp.eq.s32.totalorder %s27, 0
      %p141 = por %p139, %p140
      %p142 = scmp.ne.s32.totalorder %s131, %s134
      %p143 = scmp.eq.s32.totalorder %s32, 1
      %p144 = por %p142, %p143
      %p145 = scmp.ne.s32.totalorder %s134, %s135
      %p146 = scmp.eq.s32.totalorder %s32, 0
      %p147 = por %p145, %p146
      %p148 = scmp.ne.s32.totalorder %s134, %s135
      %p149 = scmp.eq.s32.totalorder %s33, 1
      %p150 = por %p148, %p149
      %p152 = scmp.ne.s32.totalorder %s135, %s151
      %p153 = scmp.eq.s32.totalorder %s33, 0
      %p154 = por %p152, %p153
      %s155 = ssub.s32 %s34, %s46
      %s156 = ssub.s32 %s35, %s42
      %s157 = sor.u32 %s155, %s156
      %p158 = scmp.eq.s32.totalorder %s157, 0
      %s160 = sadd.s32 %s159, 1
      %s161 = scalar_select %p158, %s159, %s160
      %p164 = pneg %p158
      %p165 = scmp.eq.s32.totalorder %s27, 1
      %p166 = por %p164, %p165
      %p167 = scmp.ne.s32.totalorder %s159, %s162
      %p168 = scmp.eq.s32.totalorder %s27, 0
      %p169 = por %p167, %p168
      %p170 = scmp.ne.s32.totalorder %s159, %s162
      %p171 = scmp.eq.s32.totalorder %s32, 1
      %p172 = por %p170, %p171
      %p173 = scmp.ne.s32.totalorder %s162, %s163
      %p174 = scmp.eq.s32.totalorder %s32, 0
      %p175 = por %p173, %p174
      %p176 = scmp.ne.s32.totalorder %s162, %s163
      %p177 = scmp.eq.s32.totalorder %s33, 1
      %p178 = por %p176, %p177
      %p180 = scmp.ne.s32.totalorder %s163, %s179
      %p181 = scmp.eq.s32.totalorder %s33, 0
      %p182 = por %p180, %p181
      %s183 = ssub.s32 %s34, %s46
      %s184 = ssub.s32 %s35, %s42
      %s185 = sor.u32 %s183, %s184
      %p186 = scmp.eq.s32.totalorder %s185, 0
      %s188 = sadd.s32 %s187, 1
      %s189 = scalar_select %p186, %s187, %s188
      %p192 = pneg %p186
      %p193 = scmp.eq.s32.totalorder %s27, 1
      %p194 = por %p192, %p193
      %p195 = scmp.ne.s32.totalorder %s187, %s190
      %p196 = scmp.eq.s32.totalorder %s27, 0
      %p197 = por %p195, %p196
      %p198 = scmp.ne.s32.totalorder %s187, %s190
      %p199 = scmp.eq.s32.totalorder %s32, 1
      %p200 = por %p198, %p199
      %p201 = scmp.ne.s32.totalorder %s190, %s191
      %p202 = scmp.eq.s32.totalorder %s32, 0
      %p203 = por %p201, %p202
      %p204 = scmp.ne.s32.totalorder %s190, %s191
      %p205 = scmp.eq.s32.totalorder %s33, 1
      %p206 = por %p204, %p205
      %p208 = scmp.ne.s32.totalorder %s191, %s207
      %p209 = scmp.eq.s32.totalorder %s33, 0
      %p210 = por %p208, %p209
      %p211 = scmp.le.s32.totalorder 1, %s27
      %p212 = scmp.lt.s32.totalorder %s27, 3
      %p213 = pnand %p211, %p212
      %p214 = pneg %p213
      // Predicated region
      $region9: #{tpu_custom_call.1} parent=5 // pred_check
        _
      $region10: #{tpu_custom_call.1} parent=5 // pred_check_branch
        %216 = sbr.rel (%p213) target = $region12
      $region11: #{tpu_custom_call.1} parent=5 // pred_region
        %s217 = ssub.s32 %s27, 1
      $region12: #{tpu_custom_call.1} parent=5 // pred_fallthru
        _
      %p218 = scmp.lt.s32.totalorder %s27, 2
      // Predicated region
      $region13: #{tpu_custom_call.1} parent=5 // pred_check
        %p219 = pneg %p218
      $region14: #{tpu_custom_call.1} parent=5 // pred_check_branch
        %221 = sbr.rel (%p219) target = $region16
      $region15: #{tpu_custom_call.1} parent=5 // pred_region
        // Predicated region
        $region17: #{tpu_custom_call.1} parent=15 // pred_check
          %p222 = pneg %p61
        $region18: #{tpu_custom_call.1} parent=15 // pred_check_branch
          %224 = sbr.rel (%p222) target = $region20
        $region19: #{tpu_custom_call.1} parent=15 // pred_region
          %s225 = sand.u32 %s51, 1
          %s226 = scalar_lea.sflag [#allocation3], %s225
          %s227 = sand.u32 %s51, 1
          %s228 = smul.addr %s227, 32
          %s229 = scalar_lea.vmem [#allocation2], %s228
          %s230 = smul.u32 4, %s34
          %s232 = ssub.s32 512, 512
          %233 = vsyncadd %s226, %s232
          %s234 = sadd.s32 %s35, %s230
          %s235 = smul.addr %s234, 128
          %s236 = scalar_lea.hbm %s0, %s235
          %s237 = sshll.u32 %s229, 4
          %s238 = int_to_ptr.vmem [resolvable:$true] %s237
          %243 = dma.hbm_to_vmem [thread:$0]  %s236, 512, %s238, %s226, 128, 128, 8
        $region20: #{tpu_custom_call.1} parent=15 // pred_fallthru
          _
        // Predicated region
        $region21: #{tpu_custom_call.1} parent=15 // pred_check
          %p244 = pneg %p87
        $region22: #{tpu_custom_call.1} parent=15 // pred_check_branch
          %246 = sbr.rel (%p244) target = $region24
        $region23: #{tpu_custom_call.1} parent=15 // pred_region
          %s247 = sand.u32 %s27, 1
          %s248 = scalar_lea.sflag [#allocation6], %s247
          %s249 = sand.u32 %s77, 1
          %s250 = smul.addr %s249, 32
          %s251 = scalar_lea.vmem [#allocation5], %s250
          %s252 = smul.u32 4, %s34
          %s254 = ssub.s32 512, 512
          %255 = vsyncadd %s248, %s254
          %s256 = smul.addr %s252, 128
          %s257 = scalar_lea.hbm %s1, %s256
          %s258 = sshll.u32 %s251, 4
          %s259 = int_to_ptr.vmem [resolvable:$true] %s258
          %264 = dma.hbm_to_vmem [thread:$0]  %s257, 512, %s259, %s248, 128, 128, 8
        $region24: #{tpu_custom_call.1} parent=15 // pred_fallthru
          _
        // Predicated region
        $region25: #{tpu_custom_call.1} parent=15 // pred_check
          %p265 = pneg %p113
        $region26: #{tpu_custom_call.1} parent=15 // pred_check_branch
          %267 = sbr.rel (%p265) target = $region28
        $region27: #{tpu_custom_call.1} parent=15 // pred_region
          %s268 = sand.u32 %s27, 1
          %s269 = scalar_lea.sflag [#allocation6], %s268
          %s270 = sand.u32 %s103, 1
          %s271 = smul.addr %s270, 32
          %s272 = scalar_lea.vmem [#allocation7], %s271
          %s273 = smul.u32 4, %s34
          %s275 = ssub.s32 512, 512
          %276 = vsyncadd %s269, %s275
          %s277 = smul.addr %s273, 128
          %s278 = scalar_lea.hbm %s2, %s277
          %s279 = sshll.u32 %s272, 4
          %s280 = int_to_ptr.vmem [resolvable:$true] %s279
          %285 = dma.hbm_to_vmem [thread:$0]  %s278, 512, %s280, %s269, 128, 128, 8
        $region28: #{tpu_custom_call.1} parent=15 // pred_fallthru
          _
        // Predicated region
        $region29: #{tpu_custom_call.1} parent=15 // pred_check
          %p286 = pneg %p141
        $region30: #{tpu_custom_call.1} parent=15 // pred_check_branch
          %288 = sbr.rel (%p286) target = $region32
        $region31: #{tpu_custom_call.1} parent=15 // pred_region
          %s289 = sand.u32 %s131, 1
          %s290 = scalar_lea.sflag [#allocation9], %s289
          %s291 = sand.u32 %s131, 1
          %s292 = smul.addr %s291, 8
          %s293 = scalar_lea.vmem [#allocation8], %s292
          %s294 = smul.u32 4, %s34
          %s296 = ssub.s32 128, 128
          %297 = vsyncadd %s290, %s296
          %s298 = sadd.s32 %s35, %s294
          %s299 = smul.addr %s298, 32
          %s300 = scalar_lea.hbm %s3, %s299
          %s301 = sshll.u32 %s293, 4
          %s302 = int_to_ptr.vmem [resolvable:$true] %s301
          %307 = dma.hbm_to_vmem [thread:$0]  %s300, 128, %s302, %s290, 32, 32, 2
        $region32: #{tpu_custom_call.1} parent=15 // pred_fallthru
          _
      $region16: #{tpu_custom_call.1} parent=5 // pred_fallthru
        _
      %p308 = scmp.le.s32.totalorder 1, %s27
      %p309 = scmp.lt.s32.totalorder %s27, 3
      %p310 = pnand %p308, %p309
      %p311 = pneg %p310
      // Predicated region
      $region33: #{tpu_custom_call.1} parent=5 // pred_check
        _
      $region34: #{tpu_custom_call.1} parent=5 // pred_check_branch
        %313 = sbr.rel (%p310) target = $region36
      $region35: #{tpu_custom_call.1} parent=5 // pred_region
        %s314 = ssub.s32 %s27, 1
        %s315 = sand.u32 %s54, 1
        %s316 = scalar_lea.sflag [#allocation3], %s315
        %s317 = sand.u32 %s54, 1
        %s318 = smul.addr %s317, 32
        %s319 = scalar_lea.vmem [#allocation2], %s318
        // Predicated region
        $region37: #{tpu_custom_call.1} parent=35 // pred_check
          %p320 = pneg %p67
        $region38: #{tpu_custom_call.1} parent=35 // pred_check_branch
          %322 = sbr.rel (%p320) target = $region40
        $region39: #{tpu_custom_call.1} parent=35 // pred_region
          %323 = dma.done %s316, 512
        $region40: #{tpu_custom_call.1} parent=35 // pred_fallthru
          _
        %s324 = sand.u32 %s32, 1
        %s325 = scalar_lea.sflag [#allocation6], %s324
        %s326 = sand.u32 %s80, 1
        %s327 = smul.addr %s326, 32
        %s328 = scalar_lea.vmem [#allocation5], %s327
        // Predicated region
        $region41: #{tpu_custom_call.1} parent=35 // pred_check
          %p329 = pneg %p93
        $region42: #{tpu_custom_call.1} parent=35 // pred_check_branch
          %331 = sbr.rel (%p329) target = $region44
        $region43: #{tpu_custom_call.1} parent=35 // pred_region
          %332 = dma.done %s325, 512
        $region44: #{tpu_custom_call.1} parent=35 // pred_fallthru
          _
        %s333 = sand.u32 %s32, 1
        %s334 = scalar_lea.sflag [#allocation6], %s333
        %s335 = sand.u32 %s106, 1
        %s336 = smul.addr %s335, 32
        %s337 = scalar_lea.vmem [#allocation7], %s336
        // Predicated region
        $region45: #{tpu_custom_call.1} parent=35 // pred_check
          %p338 = pneg %p119
        $region46: #{tpu_custom_call.1} parent=35 // pred_check_branch
          %340 = sbr.rel (%p338) target = $region48
        $region47: #{tpu_custom_call.1} parent=35 // pred_region
          %341 = dma.done %s334, 512
        $region48: #{tpu_custom_call.1} parent=35 // pred_fallthru
          _
        %s342 = sand.u32 %s134, 1
        %s343 = scalar_lea.sflag [#allocation9], %s342
        %s344 = sand.u32 %s134, 1
        %s345 = smul.addr %s344, 8
        %s346 = scalar_lea.vmem [#allocation8], %s345
        // Predicated region
        $region49: #{tpu_custom_call.1} parent=35 // pred_check
          %p347 = pneg %p147
        $region50: #{tpu_custom_call.1} parent=35 // pred_check_branch
          %349 = sbr.rel (%p347) target = $region52
        $region51: #{tpu_custom_call.1} parent=35 // pred_region
          %350 = dma.done %s343, 128
        $region52: #{tpu_custom_call.1} parent=35 // pred_fallthru
          _
        %s351 = sand.u32 %s54, 1
        %s352 = scalar_lea.sflag [#allocation3], %s351
        %s353 = sand.u32 %s54, 1
        %s354 = smul.addr %s353, 32
        %s355 = scalar_lea.vmem [#allocation2], %s354
        %p356 = pneg %p67
        %p357 = pneg %p64
        %s358 = sand.u32 %s32, 1
        %s359 = scalar_lea.sflag [#allocation6], %s358
        %s360 = sand.u32 %s80, 1
        %s361 = smul.addr %s360, 32
        %s362 = scalar_lea.vmem [#allocation5], %s361
        %p363 = pneg %p93
        %p364 = pneg %p90
        %s365 = sand.u32 %s32, 1
        %s366 = scalar_lea.sflag [#allocation6], %s365
        %s367 = sand.u32 %s106, 1
        %s368 = smul.addr %s367, 32
        %s369 = scalar_lea.vmem [#allocation7], %s368
        %p370 = pneg %p119
        %p371 = pneg %p116
        %s372 = sand.u32 %s134, 1
        %s373 = scalar_lea.sflag [#allocation9], %s372
        %s374 = sand.u32 %s134, 1
        %s375 = smul.addr %s374, 8
        %s376 = scalar_lea.vmem [#allocation8], %s375
        %p377 = pneg %p147
        %p378 = pneg %p144
        %p379 = pneg %p175
        %p380 = pneg %p172
        %s381 = sand.u32 %s162, 1
        %s382 = scalar_lea.sflag [#allocation4], %s381
        %s383 = sand.u32 %s162, 1
        %s384 = smul.addr %s383, 8
        %s385 = scalar_lea.vmem [#allocation10], %s384
        %p386 = pneg %p203
        %p387 = pneg %p200
        %s388 = sand.u32 %s190, 1
        %s389 = scalar_lea.sflag [#allocation12], %s388
        %s390 = sand.u32 %s190, 1
        %s391 = smul.addr %s390, 32
        %s392 = scalar_lea.vmem [#allocation11], %s391
        %s393 = smul.u32 4, %s36
        %s394 = smul.u32 4, %s36
        %s395 = smul.u32 4, %s36
        %s396 = smul.u32 4, %s36
        %s397 = smul.u32 4, %s36
        %v400 = vld [vmem:[%s319] sm:$0xff]
        %v401 = vld [vmem:[%s319 + $0x8] sm:$0xff]
        %v402 = vld [vmem:[%s319 + $0x10] sm:$0xff]
        %v403 = vld [vmem:[%s319 + $0x18] sm:$0xff]
        %v404 = vmul.f32 %v400, 0.17677669
        %v405 = vmul.f32 %v401, 0.17677669
        %v406 = vmul.f32 %v402, 0.17677669
        %v407 = vmul.f32 %v403, 0.17677669
        %v408 = vld [vmem:[%s328] sm:$0xff]
        %v409 = vld [vmem:[%s328 + $0x8] sm:$0xff]
        %v410 = vld [vmem:[%s328 + $0x10] sm:$0xff]
        %v411 = vld [vmem:[%s328 + $0x18] sm:$0xff]
        %v412 = vld [vmem:[%s337] sm:$0xff]
        %v413 = vld [vmem:[%s337 + $0x8] sm:$0xff]
        %v414 = vld [vmem:[%s337 + $0x10] sm:$0xff]
        %v415 = vld [vmem:[%s337 + $0x18] sm:$0xff]
        %v416 = vld [vmem:[%s346] sm:$0x3]
        %v417 = vld [vmem:[%s346 + $0x2] sm:$0x3]
        %v418 = vld [vmem:[%s346 + $0x4] sm:$0x3]
        %v419 = vld [vmem:[%s346 + $0x6] sm:$0x3]
        %vm420 = vcmask 261120
        %v422 = vsel %vm420, %v404, 0
        %v425 = vsel %vm420, %v408, 0
        %427 = vmatprep.subr.mxu0 0.0
        %428 = vmatpush1.xpose.msra.mxu0 %v425
        %429 = vmatprep.subr.mxu0 0.0
        %430 = vmatpush1.xpose.msra.mxu0 0.0
        %431 = vmatprep.subr.mxu0 0.0
        %432 = vmatpush1.xpose.msra.mxu0 0.0
        %433 = vmatprep.subr.mxu0 0.0
        %434 = vmatpush1.xpose.msra.mxu0 0.0
        %435 = vmatprep.subr.mxu0 0.0
        %436 = vmatpush1.xpose.msra.mxu0 0.0
        %437 = vmatprep.subr.mxu0 0.0
        %438 = vmatpush1.xpose.msra.mxu0 0.0
        %439 = vmatprep.subr.mxu0 0.0
        %440 = vmatpush1.xpose.msra.mxu0 0.0
        %441 = vmatprep.subr.mxu0 0.0
        %442 = vmatpush1.xpose.msra.mxu0 0.0
        %443 = vmatprep.subr.mxu0 0.0
        %444 = vmatpush1.xpose.msra.mxu0 0.0
        %445 = vmatprep.subr.mxu0 0.0
        %446 = vmatpush1.xpose.msra.mxu0 0.0
        %447 = vmatprep.subr.mxu0 0.0
        %448 = vmatpush1.xpose.msra.mxu0 0.0
        %449 = vmatprep.subr.mxu0 0.0
        %450 = vmatpush1.xpose.msra.mxu0 0.0
        %451 = vmatprep.subr.mxu0 0.0
        %452 = vmatpush1.xpose.msra.mxu0 0.0
        %453 = vmatprep.subr.mxu0 0.0
        %454 = vmatpush1.xpose.msra.mxu0 0.0
        %455 = vmatprep.subr.mxu0 0.0
        %456 = vmatpush1.xpose.msra.mxu0 0.0
        %457 = vmatprep.subr.mxu0 0.0
        %458 = vmatpush1.xpose.msra.mxu0 0.0
        %459 = vmatprep.subr.mxu0 0.0
        %460 = vmatpush1.xpose.msra.mxu0 0.0
        %461 = vmatprep.subr.mxu0 0.0
        %462 = vmatpush1.xpose.msra.mxu0 0.0
        %463 = vmatprep.subr.mxu0 0.0
        %464 = vmatpush1.xpose.msra.mxu0 0.0
        %465 = vmatprep.subr.mxu0 0.0
        %466 = vmatpush1.xpose.msra.mxu0 0.0
        %467 = vmatprep.subr.mxu0 0.0
        %468 = vmatpush1.xpose.msra.mxu0 0.0
        %469 = vmatprep.subr.mxu0 0.0
        %470 = vmatpush1.xpose.msra.mxu0 0.0
        %471 = vmatprep.subr.mxu0 0.0
        %472 = vmatpush1.xpose.msra.mxu0 0.0
        %473 = vmatprep.subr.mxu0 0.0
        %474 = vmatpush1.xpose.msra.mxu0 0.0
        %475 = vmatprep.subr.mxu0 0.0
        %476 = vmatpush1.xpose.msra.mxu0 0.0
        %477 = vmatprep.subr.mxu0 0.0
        %478 = vmatpush1.xpose.msra.mxu0 0.0
        %479 = vmatprep.subr.mxu0 0.0
        %480 = vmatpush1.xpose.msra.mxu0 0.0
        %481 = vmatprep.subr.mxu0 0.0
        %482 = vmatpush1.xpose.msra.mxu0 0.0
        %483 = vmatprep.subr.mxu0 0.0
        %484 = vmatpush1.xpose.msra.mxu0 0.0
        %485 = vmatprep.subr.mxu0 0.0
        %486 = vmatpush1.xpose.msra.mxu0 0.0
        %487 = vmatprep.subr.mxu0 0.0
        %488 = vmatpush1.xpose.msra.mxu0 0.0
        %489 = vmatprep.subr.mxu0 0.0
        %490 = vmatpush1.xpose.msra.mxu0 0.0
        %491 = vmatprep.mubr.f32.mxu0 0.0
        %492 = vmatmul.mubr.f32.gmra.mrb[0].mxu0 %v422
        %v493 = vpop.f32.mrb[0].mxu0
        %v494 = vadd.f32 0.0, %v493
        %v495 = vpop.f32.mrb[0].mxu0
        %496 = vdwg.mxu0
        %v498 = vsel %vm420, %v405, 0
        %v501 = vsel %vm420, %v409, 0
        %503 = vmatprep.subr.mxu0 0.0
        %504 = vmatpush1.xpose.msra.mxu0 %v501
        %505 = vmatprep.subr.mxu0 0.0
        %506 = vmatpush1.xpose.msra.mxu0 0.0
        %507 = vmatprep.subr.mxu0 0.0
        %508 = vmatpush1.xpose.msra.mxu0 0.0
        %509 = vmatprep.subr.mxu0 0.0
        %510 = vmatpush1.xpose.msra.mxu0 0.0
        %511 = vmatprep.subr.mxu0 0.0
        %512 = vmatpush1.xpose.msra.mxu0 0.0
        %513 = vmatprep.subr.mxu0 0.0
        %514 = vmatpush1.xpose.msra.mxu0 0.0
        %515 = vmatprep.subr.mxu0 0.0
        %516 = vmatpush1.xpose.msra.mxu0 0.0
        %517 = vmatprep.subr.mxu0 0.0
        %518 = vmatpush1.xpose.msra.mxu0 0.0
        %519 = vmatprep.subr.mxu0 0.0
        %520 = vmatpush1.xpose.msra.mxu0 0.0
        %521 = vmatprep.subr.mxu0 0.0
        %522 = vmatpush1.xpose.msra.mxu0 0.0
        %523 = vmatprep.subr.mxu0 0.0
        %524 = vmatpush1.xpose.msra.mxu0 0.0
        %525 = vmatprep.subr.mxu0 0.0
        %526 = vmatpush1.xpose.msra.mxu0 0.0
        %527 = vmatprep.subr.mxu0 0.0
        %528 = vmatpush1.xpose.msra.mxu0 0.0
        %529 = vmatprep.subr.mxu0 0.0
        %530 = vmatpush1.xpose.msra.mxu0 0.0
        %531 = vmatprep.subr.mxu0 0.0
        %532 = vmatpush1.xpose.msra.mxu0 0.0
        %533 = vmatprep.subr.mxu0 0.0
        %534 = vmatpush1.xpose.msra.mxu0 0.0
        %535 = vmatprep.subr.mxu0 0.0
        %536 = vmatpush1.xpose.msra.mxu0 0.0
        %537 = vmatprep.subr.mxu0 0.0
        %538 = vmatpush1.xpose.msra.mxu0 0.0
        %539 = vmatprep.subr.mxu0 0.0
        %540 = vmatpush1.xpose.msra.mxu0 0.0
        %541 = vmatprep.subr.mxu0 0.0
        %542 = vmatpush1.xpose.msra.mxu0 0.0
        %543 = vmatprep.subr.mxu0 0.0
        %544 = vmatpush1.xpose.msra.mxu0 0.0
        %545 = vmatprep.subr.mxu0 0.0
        %546 = vmatpush1.xpose.msra.mxu0 0.0
        %547 = vmatprep.subr.mxu0 0.0
        %548 = vmatpush1.xpose.msra.mxu0 0.0
        %549 = vmatprep.subr.mxu0 0.0
        %550 = vmatpush1.xpose.msra.mxu0 0.0
        %551 = vmatprep.subr.mxu0 0.0
        %552 = vmatpush1.xpose.msra.mxu0 0.0
        %553 = vmatprep.subr.mxu0 0.0
        %554 = vmatpush1.xpose.msra.mxu0 0.0
        %555 = vmatprep.subr.mxu0 0.0
        %556 = vmatpush1.xpose.msra.mxu0 0.0
        %557 = vmatprep.subr.mxu0 0.0
        %558 = vmatpush1.xpose.msra.mxu0 0.0
        %559 = vmatprep.subr.mxu0 0.0
        %560 = vmatpush1.xpose.msra.mxu0 0.0
        %561 = vmatprep.subr.mxu0 0.0
        %562 = vmatpush1.xpose.msra.mxu0 0.0
        %563 = vmatprep.subr.mxu0 0.0
        %564 = vmatpush1.xpose.msra.mxu0 0.0
        %565 = vmatprep.subr.mxu0 0.0
        %566 = vmatpush1.xpose.msra.mxu0 0.0
        %567 = vmatprep.mubr.f32.mxu0 0.0
        %568 = vmatmul.mubr.f32.gmra.mrb[0].mxu0 %v498
        %v569 = vpop.f32.mrb[0].mxu0
        %v570 = vadd.f32 0.0, %v569
        %v571 = vpop.f32.mrb[0].mxu0
        %572 = vdwg.mxu0
        %v574 = vsel %vm420, %v406, 0
        %v577 = vsel %vm420, %v410, 0
        %579 = vmatprep.subr.mxu0 0.0
        %580 = vmatpush1.xpose.msra.mxu0 %v577
        %581 = vmatprep.subr.mxu0 0.0
        %582 = vmatpush1.xpose.msra.mxu0 0.0
        %583 = vmatprep.subr.mxu0 0.0
        %584 = vmatpush1.xpose.msra.mxu0 0.0
        %585 = vmatprep.subr.mxu0 0.0
        %586 = vmatpush1.xpose.msra.mxu0 0.0
        %587 = vmatprep.subr.mxu0 0.0
        %588 = vmatpush1.xpose.msra.mxu0 0.0
        %589 = vmatprep.subr.mxu0 0.0
        %590 = vmatpush1.xpose.msra.mxu0 0.0
        %591 = vmatprep.subr.mxu0 0.0
        %592 = vmatpush1.xpose.msra.mxu0 0.0
        %593 = vmatprep.subr.mxu0 0.0
        %594 = vmatpush1.xpose.msra.mxu0 0.0
        %595 = vmatprep.subr.mxu0 0.0
        %596 = vmatpush1.xpose.msra.mxu0 0.0
        %597 = vmatprep.subr.mxu0 0.0
        %598 = vmatpush1.xpose.msra.mxu0 0.0
        %599 = vmatprep.subr.mxu0 0.0
        %600 = vmatpush1.xpose.msra.mxu0 0.0
        %601 = vmatprep.subr.mxu0 0.0
        %602 = vmatpush1.xpose.msra.mxu0 0.0
        %603 = vmatprep.subr.mxu0 0.0
        %604 = vmatpush1.xpose.msra.mxu0 0.0
        %605 = vmatprep.subr.mxu0 0.0
        %606 = vmatpush1.xpose.msra.mxu0 0.0
        %607 = vmatprep.subr.mxu0 0.0
        %608 = vmatpush1.xpose.msra.mxu0 0.0
        %609 = vmatprep.subr.mxu0 0.0
        %610 = vmatpush1.xpose.msra.mxu0 0.0
        %611 = vmatprep.subr.mxu0 0.0
        %612 = vmatpush1.xpose.msra.mxu0 0.0
        %613 = vmatprep.subr.mxu0 0.0
        %614 = vmatpush1.xpose.msra.mxu0 0.0
        %615 = vmatprep.subr.mxu0 0.0
        %616 = vmatpush1.xpose.msra.mxu0 0.0
        %617 = vmatprep.subr.mxu0 0.0
        %618 = vmatpush1.xpose.msra.mxu0 0.0
        %619 = vmatprep.subr.mxu0 0.0
        %620 = vmatpush1.xpose.msra.mxu0 0.0
        %621 = vmatprep.subr.mxu0 0.0
        %622 = vmatpush1.xpose.msra.mxu0 0.0
        %623 = vmatprep.subr.mxu0 0.0
        %624 = vmatpush1.xpose.msra.mxu0 0.0
        %625 = vmatprep.subr.mxu0 0.0
        %626 = vmatpush1.xpose.msra.mxu0 0.0
        %627 = vmatprep.subr.mxu0 0.0
        %628 = vmatpush1.xpose.msra.mxu0 0.0
        %629 = vmatprep.subr.mxu0 0.0
        %630 = vmatpush1.xpose.msra.mxu0 0.0
        %631 = vmatprep.subr.mxu0 0.0
        %632 = vmatpush1.xpose.msra.mxu0 0.0
        %633 = vmatprep.subr.mxu0 0.0
        %634 = vmatpush1.xpose.msra.mxu0 0.0
        %635 = vmatprep.subr.mxu0 0.0
        %636 = vmatpush1.xpose.msra.mxu0 0.0
        %637 = vmatprep.subr.mxu0 0.0
        %638 = vmatpush1.xpose.msra.mxu0 0.0
        %639 = vmatprep.subr.mxu0 0.0
        %640 = vmatpush1.xpose.msra.mxu0 0.0
        %641 = vmatprep.subr.mxu0 0.0
        %642 = vmatpush1.xpose.msra.mxu0 0.0
        %643 = vmatprep.mubr.f32.mxu0 0.0
        %644 = vmatmul.mubr.f32.gmra.mrb[0].mxu0 %v574
        %v645 = vpop.f32.mrb[0].mxu0
        %v646 = vadd.f32 0.0, %v645
        %v647 = vpop.f32.mrb[0].mxu0
        %648 = vdwg.mxu0
        %v650 = vsel %vm420, %v407, 0
        %v653 = vsel %vm420, %v411, 0
        %655 = vmatprep.subr.mxu0 0.0
        %656 = vmatpush1.xpose.msra.mxu0 %v653
        %657 = vmatprep.subr.mxu0 0.0
        %658 = vmatpush1.xpose.msra.mxu0 0.0
        %659 = vmatprep.subr.mxu0 0.0
        %660 = vmatpush1.xpose.msra.mxu0 0.0
        %661 = vmatprep.subr.mxu0 0.0
        %662 = vmatpush1.xpose.msra.mxu0 0.0
        %663 = vmatprep.subr.mxu0 0.0
        %664 = vmatpush1.xpose.msra.mxu0 0.0
        %665 = vmatprep.subr.mxu0 0.0
        %666 = vmatpush1.xpose.msra.mxu0 0.0
        %667 = vmatprep.subr.mxu0 0.0
        %668 = vmatpush1.xpose.msra.mxu0 0.0
        %669 = vmatprep.subr.mxu0 0.0
        %670 = vmatpush1.xpose.msra.mxu0 0.0
        %671 = vmatprep.subr.mxu0 0.0
        %672 = vmatpush1.xpose.msra.mxu0 0.0
        %673 = vmatprep.subr.mxu0 0.0
        %674 = vmatpush1.xpose.msra.mxu0 0.0
        %675 = vmatprep.subr.mxu0 0.0
        %676 = vmatpush1.xpose.msra.mxu0 0.0
        %677 = vmatprep.subr.mxu0 0.0
        %678 = vmatpush1.xpose.msra.mxu0 0.0
        %679 = vmatprep.subr.mxu0 0.0
        %680 = vmatpush1.xpose.msra.mxu0 0.0
        %681 = vmatprep.subr.mxu0 0.0
        %682 = vmatpush1.xpose.msra.mxu0 0.0
        %683 = vmatprep.subr.mxu0 0.0
        %684 = vmatpush1.xpose.msra.mxu0 0.0
        %685 = vmatprep.subr.mxu0 0.0
        %686 = vmatpush1.xpose.msra.mxu0 0.0
        %687 = vmatprep.subr.mxu0 0.0
        %688 = vmatpush1.xpose.msra.mxu0 0.0
        %689 = vmatprep.subr.mxu0 0.0
        %690 = vmatpush1.xpose.msra.mxu0 0.0
        %691 = vmatprep.subr.mxu0 0.0
        %692 = vmatpush1.xpose.msra.mxu0 0.0
        %693 = vmatprep.subr.mxu0 0.0
        %694 = vmatpush1.xpose.msra.mxu0 0.0
        %695 = vmatprep.subr.mxu0 0.0
        %696 = vmatpush1.xpose.msra.mxu0 0.0
        %697 = vmatprep.subr.mxu0 0.0
        %698 = vmatpush1.xpose.msra.mxu0 0.0
        %699 = vmatprep.subr.mxu0 0.0
        %700 = vmatpush1.xpose.msra.mxu0 0.0
        %701 = vmatprep.subr.mxu0 0.0
        %702 = vmatpush1.xpose.msra.mxu0 0.0
        %703 = vmatprep.subr.mxu0 0.0
        %704 = vmatpush1.xpose.msra.mxu0 0.0
        %705 = vmatprep.subr.mxu0 0.0
        %706 = vmatpush1.xpose.msra.mxu0 0.0
        %707 = vmatprep.subr.mxu0 0.0
        %708 = vmatpush1.xpose.msra.mxu0 0.0
        %709 = vmatprep.subr.mxu0 0.0
        %710 = vmatpush1.xpose.msra.mxu0 0.0
        %711 = vmatprep.subr.mxu0 0.0
        %712 = vmatpush1.xpose.msra.mxu0 0.0
        %713 = vmatprep.subr.mxu0 0.0
        %714 = vmatpush1.xpose.msra.mxu0 0.0
        %715 = vmatprep.subr.mxu0 0.0
        %716 = vmatpush1.xpose.msra.mxu0 0.0
        %717 = vmatprep.subr.mxu0 0.0
        %718 = vmatpush1.xpose.msra.mxu0 0.0
        %719 = vmatprep.mubr.f32.mxu0 0.0
        %720 = vmatmul.mubr.f32.gmra.mrb[0].mxu0 %v650
        %v721 = vpop.f32.mrb[0].mxu0
        %v722 = vadd.f32 0.0, %v721
        %v723 = vpop.f32.mrb[0].mxu0
        %724 = vdwg.mxu0
        %vm725 = vnez %v416
        %vm726 = vnez %v417
        %vm727 = vnez %v418
        %vm728 = vnez %v419
        %v729 = vsel %vm725, 16843009, 0
        %v730 = vsel %vm726, 16843009, 0
        %v731 = vsel %vm727, 16843009, 0
        %v732 = vsel %vm728, 16843009, 0
        %v733 = vunpack.c.0.s8 %v729
        %v734 = vunpack.c.0.s8 %v730
        %v735 = vunpack.c.0.s8 %v731
        %v736 = vunpack.c.0.s8 %v732
        %vm737 = vcmp.ne.s32.totalorder %v733, 0
        %vm738 = vcmp.ne.s32.totalorder %v734, 0
        %vm739 = vcmp.ne.s32.totalorder %v735, 0
        %vm740 = vcmp.ne.s32.totalorder %v736, 0
        %v741 = vsel %vm737, -1e+09, %v494
        %v742 = vsel %vm738, -1e+09, %v570
        %v743 = vsel %vm739, -1e+09, %v646
        %v744 = vsel %vm740, -1e+09, %v722
        %vm745 = vcmask 64512
        %v746 = vsel %vm745, %v741, -inf
        %747 = vmax.xlane.f32.xlu0 %v746
        %v748 = vpop.xlane.xlu0 %747
        %v749 = vsel %vm745, %v742, -inf
        %750 = vmax.xlane.f32.xlu0 %v749
        %v751 = vpop.xlane.xlu0 %750
        %v752 = vsel %vm745, %v743, -inf
        %753 = vmax.xlane.f32.xlu0 %v752
        %v754 = vpop.xlane.xlu0 %753
        %v755 = vsel %vm745, %v744, -inf
        %756 = vmax.xlane.f32.xlu0 %v755
        %v757 = vpop.xlane.xlu0 %756
        %v758 = vsub.f32 %v741, %v748
        %v759 = vsub.f32 %v742, %v751
        %v760 = vsub.f32 %v743, %v754
        %v761 = vsub.f32 %v744, %v757
        %v762 = vmul.f32 %v758, 1.442695
        %v763 = vpow.pop %v762
        %v764 = vmul.f32 %v759, 1.442695
        %v765 = vpow.pop %v764
        %v766 = vmul.f32 %v760, 1.442695
        %v767 = vpow.pop %v766
        %v768 = vmul.f32 %v761, 1.442695
        %v769 = vpow.pop %v768
        %v770 = vsel %vm745, %v763, 0.0
        %771 = vadd.xlane.f32.xlu0 %v770
        %v772 = vpop.xlane.xlu0 %771
        %v773 = vsel %vm745, %v765, 0.0
        %774 = vadd.xlane.f32.xlu0 %v773
        %v775 = vpop.xlane.xlu0 %774
        %v776 = vsel %vm745, %v767, 0.0
        %777 = vadd.xlane.f32.xlu0 %v776
        %v778 = vpop.xlane.xlu0 %777
        %v779 = vsel %vm745, %v769, 0.0
        %780 = vadd.xlane.f32.xlu0 %v779
        %v781 = vpop.xlane.xlu0 %780
        %v782 = vrcp.pop %v772
        %v783 = vrcp.pop %v775
        %v784 = vrcp.pop %v778
        %v785 = vrcp.pop %v781
        %v786 = vmul.f32 %v763, %v782
        %v787 = vmul.f32 %v765, %v783
        %v788 = vmul.f32 %v767, %v784
        %v789 = vmul.f32 %v769, %v785
        %790 = vst.msk [vmem:[%s392] sm:$0xff] %vm745, %v786
        %791 = vst.msk [vmem:[%s392 + $0x8] sm:$0xff] %vm745, %v787
        %792 = vst.msk [vmem:[%s392 + $0x10] sm:$0xff] %vm745, %v788
        %793 = vst.msk [vmem:[%s392 + $0x18] sm:$0xff] %vm745, %v789
        %v795 = vsel %vm745, %v786, 0
        %797 = vmatprep.subr.mxu0 0.0
        %798 = vmatpush1.msra.mxu0 %v412
        %799 = vmatprep.subr.mxu0 0.0
        %800 = vmatpush1.msra.mxu0 0.0
        %801 = vmatprep.subr.mxu0 0.0
        %802 = vmatpush1.msra.mxu0 0.0
        %803 = vmatprep.subr.mxu0 0.0
        %804 = vmatpush1.msra.mxu0 0.0
        %805 = vmatprep.subr.mxu0 0.0
        %806 = vmatpush1.msra.mxu0 0.0
        %807 = vmatprep.subr.mxu0 0.0
        %808 = vmatpush1.msra.mxu0 0.0
        %809 = vmatprep.subr.mxu0 0.0
        %810 = vmatpush1.msra.mxu0 0.0
        %811 = vmatprep.subr.mxu0 0.0
        %812 = vmatpush1.msra.mxu0 0.0
        %813 = vmatprep.subr.mxu0 0.0
        %814 = vmatpush1.msra.mxu0 0.0
        %815 = vmatprep.subr.mxu0 0.0
        %816 = vmatpush1.msra.mxu0 0.0
        %817 = vmatprep.subr.mxu0 0.0
        %818 = vmatpush1.msra.mxu0 0.0
        %819 = vmatprep.subr.mxu0 0.0
        %820 = vmatpush1.msra.mxu0 0.0
        %821 = vmatprep.subr.mxu0 0.0
        %822 = vmatpush1.msra.mxu0 0.0
        %823 = vmatprep.subr.mxu0 0.0
        %824 = vmatpush1.msra.mxu0 0.0
        %825 = vmatprep.subr.mxu0 0.0
        %826 = vmatpush1.msra.mxu0 0.0
        %827 = vmatprep.subr.mxu0 0.0
        %828 = vmatpush1.msra.mxu0 0.0
        %829 = vmatprep.subr.mxu0 0.0
        %830 = vmatpush1.msra.mxu0 0.0
        %831 = vmatprep.subr.mxu0 0.0
        %832 = vmatpush1.msra.mxu0 0.0
        %833 = vmatprep.subr.mxu0 0.0
        %834 = vmatpush1.msra.mxu0 0.0
        %835 = vmatprep.subr.mxu0 0.0
        %836 = vmatpush1.msra.mxu0 0.0
        %837 = vmatprep.subr.mxu0 0.0
        %838 = vmatpush1.msra.mxu0 0.0
        %839 = vmatprep.subr.mxu0 0.0
        %840 = vmatpush1.msra.mxu0 0.0
        %841 = vmatprep.subr.mxu0 0.0
        %842 = vmatpush1.msra.mxu0 0.0
        %843 = vmatprep.subr.mxu0 0.0
        %844 = vmatpush1.msra.mxu0 0.0
        %845 = vmatprep.subr.mxu0 0.0
        %846 = vmatpush1.msra.mxu0 0.0
        %847 = vmatprep.subr.mxu0 0.0
        %848 = vmatpush1.msra.mxu0 0.0
        %849 = vmatprep.subr.mxu0 0.0
        %850 = vmatpush1.msra.mxu0 0.0
        %851 = vmatprep.subr.mxu0 0.0
        %852 = vmatpush1.msra.mxu0 0.0
        %853 = vmatprep.subr.mxu0 0.0
        %854 = vmatpush1.msra.mxu0 0.0
        %855 = vmatprep.subr.mxu0 0.0
        %856 = vmatpush1.msra.mxu0 0.0
        %857 = vmatprep.subr.mxu0 0.0
        %858 = vmatpush1.msra.mxu0 0.0
        %859 = vmatprep.subr.mxu0 0.0
        %860 = vmatpush1.msra.mxu0 0.0
        %861 = vmatprep.mubr.f32.mxu0 0.0
        %862 = vmatmul.mubr.f32.gmra.mrb[0].mxu0 %v795
        %v863 = vpop.f32.mrb[0].mxu0
        %v864 = vadd.f32 0.0, %v863
        %v865 = vpop.f32.mrb[0].mxu0
        %866 = vdwg.mxu0
        %v868 = vsel %vm745, %v787, 0
        %870 = vmatprep.subr.mxu0 0.0
        %871 = vmatpush1.msra.mxu0 %v413
        %872 = vmatprep.subr.mxu0 0.0
        %873 = vmatpush1.msra.mxu0 0.0
        %874 = vmatprep.subr.mxu0 0.0
        %875 = vmatpush1.msra.mxu0 0.0
        %876 = vmatprep.subr.mxu0 0.0
        %877 = vmatpush1.msra.mxu0 0.0
        %878 = vmatprep.subr.mxu0 0.0
        %879 = vmatpush1.msra.mxu0 0.0
        %880 = vmatprep.subr.mxu0 0.0
        %881 = vmatpush1.msra.mxu0 0.0
        %882 = vmatprep.subr.mxu0 0.0
        %883 = vmatpush1.msra.mxu0 0.0
        %884 = vmatprep.subr.mxu0 0.0
        %885 = vmatpush1.msra.mxu0 0.0
        %886 = vmatprep.subr.mxu0 0.0
        %887 = vmatpush1.msra.mxu0 0.0
        %888 = vmatprep.subr.mxu0 0.0
        %889 = vmatpush1.msra.mxu0 0.0
        %890 = vmatprep.subr.mxu0 0.0
        %891 = vmatpush1.msra.mxu0 0.0
        %892 = vmatprep.subr.mxu0 0.0
        %893 = vmatpush1.msra.mxu0 0.0
        %894 = vmatprep.subr.mxu0 0.0
        %895 = vmatpush1.msra.mxu0 0.0
        %896 = vmatprep.subr.mxu0 0.0
        %897 = vmatpush1.msra.mxu0 0.0
        %898 = vmatprep.subr.mxu0 0.0
        %899 = vmatpush1.msra.mxu0 0.0
        %900 = vmatprep.subr.mxu0 0.0
        %901 = vmatpush1.msra.mxu0 0.0
        %902 = vmatprep.subr.mxu0 0.0
        %903 = vmatpush1.msra.mxu0 0.0
        %904 = vmatprep.subr.mxu0 0.0
        %905 = vmatpush1.msra.mxu0 0.0
        %906 = vmatprep.subr.mxu0 0.0
        %907 = vmatpush1.msra.mxu0 0.0
        %908 = vmatprep.subr.mxu0 0.0
        %909 = vmatpush1.msra.mxu0 0.0
        %910 = vmatprep.subr.mxu0 0.0
        %911 = vmatpush1.msra.mxu0 0.0
        %912 = vmatprep.subr.mxu0 0.0
        %913 = vmatpush1.msra.mxu0 0.0
        %914 = vmatprep.subr.mxu0 0.0
        %915 = vmatpush1.msra.mxu0 0.0
        %916 = vmatprep.subr.mxu0 0.0
        %917 = vmatpush1.msra.mxu0 0.0
        %918 = vmatprep.subr.mxu0 0.0
        %919 = vmatpush1.msra.mxu0 0.0
        %920 = vmatprep.subr.mxu0 0.0
        %921 = vmatpush1.msra.mxu0 0.0
        %922 = vmatprep.subr.mxu0 0.0
        %923 = vmatpush1.msra.mxu0 0.0
        %924 = vmatprep.subr.mxu0 0.0
        %925 = vmatpush1.msra.mxu0 0.0
        %926 = vmatprep.subr.mxu0 0.0
        %927 = vmatpush1.msra.mxu0 0.0
        %928 = vmatprep.subr.mxu0 0.0
        %929 = vmatpush1.msra.mxu0 0.0
        %930 = vmatprep.subr.mxu0 0.0
        %931 = vmatpush1.msra.mxu0 0.0
        %932 = vmatprep.subr.mxu0 0.0
        %933 = vmatpush1.msra.mxu0 0.0
        %934 = vmatprep.mubr.f32.mxu0 0.0
        %935 = vmatmul.mubr.f32.gmra.mrb[0].mxu0 %v868
        %v936 = vpop.f32.mrb[0].mxu0
        %v937 = vadd.f32 0.0, %v936
        %v938 = vpop.f32.mrb[0].mxu0
        %939 = vdwg.mxu0
        %v941 = vsel %vm745, %v788, 0
        %943 = vmatprep.subr.mxu0 0.0
        %944 = vmatpush1.msra.mxu0 %v414
        %945 = vmatprep.subr.mxu0 0.0
        %946 = vmatpush1.msra.mxu0 0.0
        %947 = vmatprep.subr.mxu0 0.0
        %948 = vmatpush1.msra.mxu0 0.0
        %949 = vmatprep.subr.mxu0 0.0
        %950 = vmatpush1.msra.mxu0 0.0
        %951 = vmatprep.subr.mxu0 0.0
        %952 = vmatpush1.msra.mxu0 0.0
        %953 = vmatprep.subr.mxu0 0.0
        %954 = vmatpush1.msra.mxu0 0.0
        %955 = vmatprep.subr.mxu0 0.0
        %956 = vmatpush1.msra.mxu0 0.0
        %957 = vmatprep.subr.mxu0 0.0
        %958 = vmatpush1.msra.mxu0 0.0
        %959 = vmatprep.subr.mxu0 0.0
        %960 = vmatpush1.msra.mxu0 0.0
        %961 = vmatprep.subr.mxu0 0.0
        %962 = vmatpush1.msra.mxu0 0.0
        %963 = vmatprep.subr.mxu0 0.0
        %964 = vmatpush1.msra.mxu0 0.0
        %965 = vmatprep.subr.mxu0 0.0
        %966 = vmatpush1.msra.mxu0 0.0
        %967 = vmatprep.subr.mxu0 0.0
        %968 = vmatpush1.msra.mxu0 0.0
        %969 = vmatprep.subr.mxu0 0.0
        %970 = vmatpush1.msra.mxu0 0.0
        %971 = vmatprep.subr.mxu0 0.0
        %972 = vmatpush1.msra.mxu0 0.0
        %973 = vmatprep.subr.mxu0 0.0
        %974 = vmatpush1.msra.mxu0 0.0
        %975 = vmatprep.subr.mxu0 0.0
        %976 = vmatpush1.msra.mxu0 0.0
        %977 = vmatprep.subr.mxu0 0.0
        %978 = vmatpush1.msra.mxu0 0.0
        %979 = vmatprep.subr.mxu0 0.0
        %980 = vmatpush1.msra.mxu0 0.0
        %981 = vmatprep.subr.mxu0 0.0
        %982 = vmatpush1.msra.mxu0 0.0
        %983 = vmatprep.subr.mxu0 0.0
        %984 = vmatpush1.msra.mxu0 0.0
        %985 = vmatprep.subr.mxu0 0.0
        %986 = vmatpush1.msra.mxu0 0.0
        %987 = vmatprep.subr.mxu0 0.0
        %988 = vmatpush1.msra.mxu0 0.0
        %989 = vmatprep.subr.mxu0 0.0
        %990 = vmatpush1.msra.mxu0 0.0
        %991 = vmatprep.subr.mxu0 0.0
        %992 = vmatpush1.msra.mxu0 0.0
        %993 = vmatprep.subr.mxu0 0.0
        %994 = vmatpush1.msra.mxu0 0.0
        %995 = vmatprep.subr.mxu0 0.0
        %996 = vmatpush1.msra.mxu0 0.0
        %997 = vmatprep.subr.mxu0 0.0
        %998 = vmatpush1.msra.mxu0 0.0
        %999 = vmatprep.subr.mxu0 0.0
        %1000 = vmatpush1.msra.mxu0 0.0
        %1001 = vmatprep.subr.mxu0 0.0
        %1002 = vmatpush1.msra.mxu0 0.0
        %1003 = vmatprep.subr.mxu0 0.0
        %1004 = vmatpush1.msra.mxu0 0.0
        %1005 = vmatprep.subr.mxu0 0.0
        %1006 = vmatpush1.msra.mxu0 0.0
        %1007 = vmatprep.mubr.f32.mxu0 0.0
        %1008 = vmatmul.mubr.f32.gmra.mrb[0].mxu0 %v941
        %v1009 = vpop.f32.mrb[0].mxu0
        %v1010 = vadd.f32 0.0, %v1009
        %v1011 = vpop.f32.mrb[0].mxu0
        %1012 = vdwg.mxu0
        %v1014 = vsel %vm745, %v789, 0
        %1016 = vmatprep.subr.mxu0 0.0
        %1017 = vmatpush1.msra.mxu0 %v415
        %1018 = vmatprep.subr.mxu0 0.0
        %1019 = vmatpush1.msra.mxu0 0.0
        %1020 = vmatprep.subr.mxu0 0.0
        %1021 = vmatpush1.msra.mxu0 0.0
        %1022 = vmatprep.subr.mxu0 0.0
        %1023 = vmatpush1.msra.mxu0 0.0
        %1024 = vmatprep.subr.mxu0 0.0
        %1025 = vmatpush1.msra.mxu0 0.0
        %1026 = vmatprep.subr.mxu0 0.0
        %1027 = vmatpush1.msra.mxu0 0.0
        %1028 = vmatprep.subr.mxu0 0.0
        %1029 = vmatpush1.msra.mxu0 0.0
        %1030 = vmatprep.subr.mxu0 0.0
        %1031 = vmatpush1.msra.mxu0 0.0
        %1032 = vmatprep.subr.mxu0 0.0
        %1033 = vmatpush1.msra.mxu0 0.0
        %1034 = vmatprep.subr.mxu0 0.0
        %1035 = vmatpush1.msra.mxu0 0.0
        %1036 = vmatprep.subr.mxu0 0.0
        %1037 = vmatpush1.msra.mxu0 0.0
        %1038 = vmatprep.subr.mxu0 0.0
        %1039 = vmatpush1.msra.mxu0 0.0
        %1040 = vmatprep.subr.mxu0 0.0
        %1041 = vmatpush1.msra.mxu0 0.0
        %1042 = vmatprep.subr.mxu0 0.0
        %1043 = vmatpush1.msra.mxu0 0.0
        %1044 = vmatprep.subr.mxu0 0.0
        %1045 = vmatpush1.msra.mxu0 0.0
        %1046 = vmatprep.subr.mxu0 0.0
        %1047 = vmatpush1.msra.mxu0 0.0
        %1048 = vmatprep.subr.mxu0 0.0
        %1049 = vmatpush1.msra.mxu0 0.0
        %1050 = vmatprep.subr.mxu0 0.0
        %1051 = vmatpush1.msra.mxu0 0.0
        %1052 = vmatprep.subr.mxu0 0.0
        %1053 = vmatpush1.msra.mxu0 0.0
        %1054 = vmatprep.subr.mxu0 0.0
        %1055 = vmatpush1.msra.mxu0 0.0
        %1056 = vmatprep.subr.mxu0 0.0
        %1057 = vmatpush1.msra.mxu0 0.0
        %1058 = vmatprep.subr.mxu0 0.0
        %1059 = vmatpush1.msra.mxu0 0.0
        %1060 = vmatprep.subr.mxu0 0.0
        %1061 = vmatpush1.msra.mxu0 0.0
        %1062 = vmatprep.subr.mxu0 0.0
        %1063 = vmatpush1.msra.mxu0 0.0
        %1064 = vmatprep.subr.mxu0 0.0
        %1065 = vmatpush1.msra.mxu0 0.0
        %1066 = vmatprep.subr.mxu0 0.0
        %1067 = vmatpush1.msra.mxu0 0.0
        %1068 = vmatprep.subr.mxu0 0.0
        %1069 = vmatpush1.msra.mxu0 0.0
        %1070 = vmatprep.subr.mxu0 0.0
        %1071 = vmatpush1.msra.mxu0 0.0
        %1072 = vmatprep.subr.mxu0 0.0
        %1073 = vmatpush1.msra.mxu0 0.0
        %1074 = vmatprep.subr.mxu0 0.0
        %1075 = vmatpush1.msra.mxu0 0.0
        %1076 = vmatprep.subr.mxu0 0.0
        %1077 = vmatpush1.msra.mxu0 0.0
        %1078 = vmatprep.subr.mxu0 0.0
        %1079 = vmatpush1.msra.mxu0 0.0
        %1080 = vmatprep.mubr.f32.mxu0 0.0
        %1081 = vmatmul.mubr.f32.gmra.mrb[0].mxu0 %v1014
        %v1082 = vpop.f32.mrb[0].mxu0
        %v1083 = vadd.f32 0.0, %v1082
        %v1084 = vpop.f32.mrb[0].mxu0
        %1085 = vdwg.mxu0
        %1087 = vrot.lane.b32.xlu0 %v937, 32
        %v1088 = vpop.permute.xlu0 %1087
        %1091 = vrot.lane.b32.xlu0 %v1010, 64
        %v1092 = vpop.permute.xlu0 %1091
        %1095 = vrot.lane.b32.xlu0 %v1083, 96
        %v1096 = vpop.permute.xlu0 %1095
        %v1098 = vsel %vm420, %v864, %v1088
        %vm1099 = vcmask 523264
        %v1100 = vsel %vm1099, %v1098, %v1092
        %vm1101 = vcmask 785408
        %v1102 = vsel %vm1101, %v1100, %v1096
        %1103 = vst [vmem:[%s385] sm:$0xff] %v1102
        %s1104 = sand.u32 %s162, 1
        %s1105 = scalar_lea.sflag [#allocation4], %s1104
        %s1106 = sand.u32 %s162, 1
        %s1107 = smul.addr %s1106, 8
        %s1108 = scalar_lea.vmem [#allocation10], %s1107
        %s1109 = sand.u32 %s190, 1
        %s1110 = scalar_lea.sflag [#allocation12], %s1109
        %s1111 = sand.u32 %s190, 1
        %s1112 = smul.addr %s1111, 32
        %s1113 = scalar_lea.vmem [#allocation11], %s1112
        // Predicated region
        $region53: #{tpu_custom_call.1} parent=35 // pred_check
          %p1114 = pneg %p172
        $region54: #{tpu_custom_call.1} parent=35 // pred_check_branch
          %1116 = sbr.rel (%p1114) target = $region56
        $region55: #{tpu_custom_call.1} parent=35 // pred_region
          %s1118 = ssub.s32 128, 128
          %1119 = vsyncadd %s1105, %s1118
          %s1120 = sadd.s32 %s37, %s36
          %s1121 = smul.addr %s1120, 128
          %s1122 = scalar_lea.hbm %s4, %s1121
          %s1124 = sshll.u32 %s1108, 4
          %s1125 = int_to_ptr.vmem [resolvable:$true] %s1124
          %1127 = dma.vmem_to_hbm [thread:$0]  %s1125, 128, %s1122, %s1105
        $region56: #{tpu_custom_call.1} parent=35 // pred_fallthru
          _
        // Predicated region
        $region57: #{tpu_custom_call.1} parent=35 // pred_check
          %p1128 = pneg %p200
        $region58: #{tpu_custom_call.1} parent=35 // pred_check_branch
          %1130 = sbr.rel (%p1128) target = $region60
        $region59: #{tpu_custom_call.1} parent=35 // pred_region
          %s1131 = smul.u32 4, %s36
          %s1133 = ssub.s32 512, 512
          %1134 = vsyncadd %s1110, %s1133
          %s1135 = sadd.s32 %s37, %s1131
          %s1136 = smul.addr %s1135, 128
          %s1137 = scalar_lea.hbm %s5, %s1136
          %s1138 = sshll.u32 %s1113, 4
          %s1139 = int_to_ptr.vmem [resolvable:$true] %s1138
          %1144 = dma.vmem_to_hbm [thread:$0]  %s1139, 512, %s1137, %s1110, 128, 128, 8
        $region60: #{tpu_custom_call.1} parent=35 // pred_fallthru
          _
      $region36: #{tpu_custom_call.1} parent=5 // pred_fallthru
        _
      %p1145 = scmp.le.s32.totalorder 2, %s27
      // Predicated region
      $region61: #{tpu_custom_call.1} parent=5 // pred_check
        %p1146 = pneg %p1145
      $region62: #{tpu_custom_call.1} parent=5 // pred_check_branch
        %1148 = sbr.rel (%p1146) target = $region64
      $region63: #{tpu_custom_call.1} parent=5 // pred_region
        %s1149 = ssub.s32 %s27, 2
        // Predicated region
        $region65: #{tpu_custom_call.1} parent=63 // pred_check
          %p1150 = pneg %p178
        $region66: #{tpu_custom_call.1} parent=63 // pred_check_branch
          %1152 = sbr.rel (%p1150) target = $region68
        $region67: #{tpu_custom_call.1} parent=63 // pred_region
          %s1153 = sand.u32 %s163, 1
          %s1154 = scalar_lea.sflag [#allocation4], %s1153
          %s1155 = sand.u32 %s163, 1
          %s1156 = smul.addr %s1155, 8
          %s1157 = scalar_lea.vmem [#allocation10], %s1156
          %1158 = dma.done %s1154, 128
        $region68: #{tpu_custom_call.1} parent=63 // pred_fallthru
          _
        // Predicated region
        $region69: #{tpu_custom_call.1} parent=63 // pred_check
          %p1159 = pneg %p206
        $region70: #{tpu_custom_call.1} parent=63 // pred_check_branch
          %1161 = sbr.rel (%p1159) target = $region72
        $region71: #{tpu_custom_call.1} parent=63 // pred_region
          %s1162 = sand.u32 %s191, 1
          %s1163 = scalar_lea.sflag [#allocation12], %s1162
          %s1164 = sand.u32 %s191, 1
          %s1165 = smul.addr %s1164, 32
          %s1166 = scalar_lea.vmem [#allocation11], %s1165
          %1167 = dma.done %s1163, 512
        $region72: #{tpu_custom_call.1} parent=63 // pred_fallthru
          _
      $region64: #{tpu_custom_call.1} parent=5 // pred_fallthru
        _
    $region6: #{tpu_custom_call.1} parent=1 // loop_footer
      %s31 = sadd.s32 1, %s27
    $region7: #{tpu_custom_call.1} parent=1 // loop_footer_branch
      %26 = sbr.rel target = $region3
    $region8: #{tpu_custom_call.1} parent=1 // loop_exit
      _
    %1168 = vsyncpa [#allocation3], 1
    %s1169 = scalar_lea.sflag [#allocation3], 1
    %1170 = vsyncpa %s1169, 1
    %1171 = vsyncpa [#allocation6], 1
    %s1172 = scalar_lea.sflag [#allocation6], 1
    %1173 = vsyncpa %s1172, 1
    %1174 = vsyncpa [#allocation9], 1
    %s1175 = scalar_lea.sflag [#allocation9], 1
    %1176 = vsyncpa %s1175, 1
    %1177 = vsyncpa [#allocation4], 1
    %s1178 = scalar_lea.sflag [#allocation4], 1
    %1179 = vsyncpa %s1178, 1
    %1180 = vsyncpa [#allocation12], 1
    %s1181 = scalar_lea.sflag [#allocation12], 1
    %1182 = vsyncpa %s1181, 1

</llo_original>
